<compile_context>
chip_gen: v6e
topology: v6e:2x2x1
jax: 0.10.0
libtpu: 0.0.40
codegen_flags: <defaults>
</compile_context>

<pallas_src>
import functools

import jax
import jax.numpy as jnp
from jax.experimental import pallas as pl
from jax.experimental.pallas import tpu as pltpu

LANE = 128           # TPU lane width (last-dim vreg tile)
SUBLANE_BF16 = 16    # bf16 packs two rows per sublane -> keep row tiles %16


def _round_up(x: int, m: int) -> int:
    return (x + m - 1) // m * m


def ffnn_kernel(x_ref, w1_ref, b1_ref, w2_ref, b2_ref, w3_ref, b3_ref, o_ref):
    # Fused hot path: three MXU matmuls + ReLUs on one batch tile, all on-chip.
    # Inputs/weights are bf16; accumulation and bias/ReLU are f32; activations
    # are re-cast to bf16 before feeding the next matmul.
    x = x_ref[...]
    h1 = jnp.dot(x, w1_ref[...], preferred_element_type=jnp.float32) + b1_ref[...]
    h1 = jnp.maximum(h1, 0.0).astype(jnp.bfloat16)
    h2 = jnp.dot(h1, w2_ref[...], preferred_element_type=jnp.float32) + b2_ref[...]
    h2 = jnp.maximum(h2, 0.0).astype(jnp.bfloat16)
    q = jnp.dot(h2, w3_ref[...], preferred_element_type=jnp.float32) + b3_ref[...]
    o_ref[...] = q  # f32, lane-dense (out-dim padded to 128) -> unmasked stores


@functools.partial(jax.jit, static_argnames=("block_b",))
def simple_ffnn_forward(state, w1, b1, w2, b2, w3, b3, *, block_b=256):
    """state: [B, input_dim] float32 -> q_values: [B, output_dim] float32."""
    B, input_dim = state.shape
    hidden_dim = w1.shape[1]
    output_dim = w3.shape[1]

    # --- Lane-dense output: pad out-features of the last layer to 128k lanes.
    out_pad = _round_up(output_dim, LANE)
    if out_pad != output_dim:
        w3 = jnp.pad(w3, ((0, 0), (0, out_pad - output_dim)))
        b3 = jnp.pad(b3, ((0, 0), (0, out_pad - output_dim)))

    # --- Batch tiling: one grid step for small B, 1-D parallel grid otherwise.
    if B <= block_b:
        tb = _round_up(max(B, SUBLANE_BF16), SUBLANE_BF16)
    else:
        tb = block_b  # block_b must be a multiple of 16 (default 256 is)
    b_pad = _round_up(max(B, tb), tb)
    if b_pad != B:
        state = jnp.pad(state, ((0, b_pad - B), (0, 0)))

    # --- bf16 activations + weights (halves streaming DMA bytes, MXU-native);
    #     biases stay f32 and add onto the f32 accumulators.
    state_b = state.astype(jnp.bfloat16)
    w1b, w2b, w3b = (w.astype(jnp.bfloat16) for w in (w1, w2, w3))
    b1f, b2f, b3f = (b.astype(jnp.float32) for b in (b1, b2, b3))

    grid = (b_pad // tb,)
    resident = lambda shape: pl.BlockSpec(shape, lambda i: (0, 0))

    flops = 2 * b_pad * (input_dim * hidden_dim
                         + hidden_dim * hidden_dim
                         + hidden_dim * out_pad)
    bytes_accessed = (
        state_b.size * 2
        + (w1b.size + w2b.size + w3b.size) * 2
        + (b1f.size + b2f.size + b3f.size) * 4
        + b_pad * out_pad * 4
    )

    out = pl.pallas_call(
        ffnn_kernel,
        out_shape=jax.ShapeDtypeStruct((b_pad, out_pad), jnp.float32),
        grid=grid,
        in_specs=[
            pl.BlockSpec((tb, input_dim), lambda i: (i, 0)),  # streamed per tile
            resident(w1b.shape), resident(b1f.shape),         # weights/biases stay
            resident(w2b.shape), resident(b2f.shape),         # VMEM-resident across
            resident(w3b.shape), resident(b3f.shape),         # grid iterations
        ],
        out_specs=pl.BlockSpec((tb, out_pad), lambda i: (i, 0)),
        compiler_params=pltpu.CompilerParams(
            dimension_semantics=("parallel",)),
        cost_estimate=pl.CostEstimate(
            flops=flops, transcendentals=0, bytes_accessed=bytes_accessed),
    )(state_b, w1b, b1f, w2b, b2f, w3b, b3f)

    return out[:B, :output_dim]


def init_params(key, input_dim, hidden_dim, output_dim):
    """Deterministic synthetic init (Kaiming-uniform-like bounds, as in nn.Linear)."""
    ks = jax.random.split(key, 6)

    def linear(kw, kb, fan_in, fan_out):
        bound = 1.0 / jnp.sqrt(fan_in)
        w = jax.random.uniform(kw, (fan_in, fan_out), jnp.float32, -bound, bound)
        b = jax.random.uniform(kb, (1, fan_out), jnp.float32, -bound, bound)
        return w, b

    w1, b1 = linear(ks[0], ks[1], input_dim, hidden_dim)
    w2, b2 = linear(ks[2], ks[3], hidden_dim, hidden_dim)
    w3, b3 = linear(ks[4], ks[5], hidden_dim, output_dim)
    return w1, b1, w2, b2, w3, b3


def reference_forward_f32(state, w1, b1, w2, b2, w3, b3):
    h1 = jnp.maximum(state @ w1 + b1, 0.0)
    h2 = jnp.maximum(h1 @ w2 + b2, 0.0)
    return h2 @ w3 + b3


def reference_forward_bf16_path(state, w1, b1, w2, b2, w3, b3):
    """Pure-JAX reference following the same bf16-in / f32-accumulate path."""
    xb = state.astype(jnp.bfloat16)
    w1b, w2b, w3b = (w.astype(jnp.bfloat16) for w in (w1, w2, w3))
    h1 = jnp.maximum(jnp.dot(xb, w1b, preferred_element_type=jnp.float32) + b1, 0.0)
    h2 = jnp.maximum(
        jnp.dot(h1.astype(jnp.bfloat16), w2b, preferred_element_type=jnp.float32) + b2, 0.0)
    return jnp.dot(h2.astype(jnp.bfloat16), w3b, preferred_element_type=jnp.float32) + b3


if __name__ == "__main__":
    # Small shapes consistent with the module: state features=16, hidden=32, actions=8.
    batch, input_dim, hidden_dim, output_dim = 2, 16, 32, 8

    key = jax.random.PRNGKey(0)
    k_state, k_params, k_big = jax.random.split(key, 3)
    state = jax.random.normal(k_state, (batch, input_dim), jnp.float32)
    params = init_params(k_params, input_dim, hidden_dim, output_dim)

    q_values = jax.block_until_ready(simple_ffnn_forward(state, *params))
    assert q_values.shape == (batch, output_dim)

    # Exact-path check (same bf16/f32 arithmetic) -> tight tolerance.
    q_bf16_ref = reference_forward_bf16_path(state, *params)
    assert jnp.allclose(q_values, q_bf16_ref, atol=1e-3, rtol=1e-3), \
        "mismatch vs bf16-path reference"

    # f32 reference -> loose tolerance (bf16 weights/activations).
    q_f32_ref = reference_forward_f32(state, *params)
    assert jnp.allclose(q_values, q_f32_ref, atol=5e-2, rtol=5e-2), \
        "mismatch vs f32 reference"

    # Also exercise the tiled multi-grid-step path (batch > block tile).
    big_state = jax.random.normal(k_big, (512, input_dim), jnp.float32)
    q_big = jax.block_until_ready(simple_ffnn_forward(big_state, *params))
    assert q_big.shape == (512, output_dim)
    assert jnp.allclose(q_big, reference_forward_bf16_path(big_state, *params),
                        atol=1e-3, rtol=1e-3), "mismatch on tiled batch path"

    print("KERNEL_OK")
</pallas_src>

<mosaic_0001>
module attributes {stable_mosaic.version = 11 : i64} {
  func.func @ffnn_kernel(%arg0: i32, %arg1: memref<16x16xbf16, #tpu.memory_space<vmem>>, %arg2: memref<16x32xbf16, #tpu.memory_space<vmem>>, %arg3: memref<1x32xf32, #tpu.memory_space<vmem>>, %arg4: memref<32x32xbf16, #tpu.memory_space<vmem>>, %arg5: memref<1x32xf32, #tpu.memory_space<vmem>>, %arg6: memref<32x128xbf16, #tpu.memory_space<vmem>>, %arg7: memref<1x128xf32, #tpu.memory_space<vmem>>, %arg8: memref<16x128xf32, #tpu.memory_space<vmem>>) attributes {dimension_semantics = [#tpu.dimension_semantics<parallel>], iteration_bounds = array<i64: 1>, scalar_prefetch = 0 : i64, scratch_operands = 0 : i64, tpu.core_type = #tpu.core_type<tc>, window_params = [{transform_indices = @transform_0, window_bounds = array<i64: 16, 16>}, {pipeline_mode = #tpu.pipeline_mode<synchronous>, transform_indices = @transform_1, window_bounds = array<i64: 16, 32>}, {pipeline_mode = #tpu.pipeline_mode<synchronous>, transform_indices = @transform_2, window_bounds = array<i64: 1, 32>}, {pipeline_mode = #tpu.pipeline_mode<synchronous>, transform_indices = @transform_3, window_bounds = array<i64: 32, 32>}, {pipeline_mode = #tpu.pipeline_mode<synchronous>, transform_indices = @transform_4, window_bounds = array<i64: 1, 32>}, {pipeline_mode = #tpu.pipeline_mode<synchronous>, transform_indices = @transform_5, window_bounds = array<i64: 32, 128>}, {pipeline_mode = #tpu.pipeline_mode<synchronous>, transform_indices = @transform_6, window_bounds = array<i64: 1, 128>}, {transform_indices = @transform_7, window_bounds = array<i64: 16, 128>}]} {
    %c0 = arith.constant 0 : index
    %c0_0 = arith.constant 0 : index
    %0 = vector.load %arg1[%c0, %c0_0] : memref<16x16xbf16, #tpu.memory_space<vmem>>, vector<16x16xbf16>
    %c0_1 = arith.constant 0 : index
    %c0_2 = arith.constant 0 : index
    %1 = vector.load %arg2[%c0_1, %c0_2] : memref<16x32xbf16, #tpu.memory_space<vmem>>, vector<16x32xbf16>
    %cst = arith.constant dense<0.000000e+00> : vector<16x32xf32>
    %2 = tpu.matmul %0, %1, %cst {dimension_numbers = #tpu.dot_dimension_numbers<[1], [0], [0], [1], [0, 0, 1, 1], [], []>} : vector<16x16xbf16>, vector<16x32xbf16>, vector<16x32xf32> -> vector<16x32xf32>
    %c0_3 = arith.constant 0 : index
    %c0_4 = arith.constant 0 : index
    %3 = vector.load %arg3[%c0_3, %c0_4] : memref<1x32xf32, #tpu.memory_space<vmem>>, vector<1x32xf32>
    %4 = vector.broadcast %3 : vector<1x32xf32> to vector<16x32xf32>
    %5 = arith.addf %2, %4 : vector<16x32xf32>
    %cst_5 = arith.constant 0.000000e+00 : f32
    %6 = vector.broadcast %cst_5 : f32 to vector<16x32xf32>
    %7 = arith.maximumf %5, %6 : vector<16x32xf32>
    %8 = arith.truncf %7 : vector<16x32xf32> to vector<16x32xbf16>
    %c0_6 = arith.constant 0 : index
    %c0_7 = arith.constant 0 : index
    %9 = vector.load %arg4[%c0_6, %c0_7] : memref<32x32xbf16, #tpu.memory_space<vmem>>, vector<32x32xbf16>
    %cst_8 = arith.constant dense<0.000000e+00> : vector<16x32xf32>
    %10 = tpu.matmul %8, %9, %cst_8 {dimension_numbers = #tpu.dot_dimension_numbers<[1], [0], [0], [1], [0, 0, 1, 1], [], []>} : vector<16x32xbf16>, vector<32x32xbf16>, vector<16x32xf32> -> vector<16x32xf32>
    %c0_9 = arith.constant 0 : index
    %c0_10 = arith.constant 0 : index
    %11 = vector.load %arg5[%c0_9, %c0_10] : memref<1x32xf32, #tpu.memory_space<vmem>>, vector<1x32xf32>
    %12 = vector.broadcast %11 : vector<1x32xf32> to vector<16x32xf32>
    %13 = arith.addf %10, %12 : vector<16x32xf32>
    %cst_11 = arith.constant 0.000000e+00 : f32
    %14 = vector.broadcast %cst_11 : f32 to vector<16x32xf32>
    %15 = arith.maximumf %13, %14 : vector<16x32xf32>
    %16 = arith.truncf %15 : vector<16x32xf32> to vector<16x32xbf16>
    %c0_12 = arith.constant 0 : index
    %c0_13 = arith.constant 0 : index
    %17 = vector.load %arg6[%c0_12, %c0_13] : memref<32x128xbf16, #tpu.memory_space<vmem>>, vector<32x128xbf16>
    %cst_14 = arith.constant dense<0.000000e+00> : vector<16x128xf32>
    %18 = tpu.matmul %16, %17, %cst_14 {dimension_numbers = #tpu.dot_dimension_numbers<[1], [0], [0], [1], [0, 0, 1, 1], [], []>} : vector<16x32xbf16>, vector<32x128xbf16>, vector<16x128xf32> -> vector<16x128xf32>
    %c0_15 = arith.constant 0 : index
    %c0_16 = arith.constant 0 : index
    %19 = vector.load %arg7[%c0_15, %c0_16] : memref<1x128xf32, #tpu.memory_space<vmem>>, vector<1x128xf32>
    %20 = vector.broadcast %19 : vector<1x128xf32> to vector<16x128xf32>
    %21 = arith.addf %18, %20 : vector<16x128xf32>
    %c0_17 = arith.constant 0 : index
    %c0_18 = arith.constant 0 : index
    %22 = vector.load %arg8[%c0_17, %c0_18] : memref<16x128xf32, #tpu.memory_space<vmem>>, vector<16x128xf32>
    tpu.vector_store %arg8[%c0_17, %c0_18], %21 {strides = array<i32>} : memref<16x128xf32, #tpu.memory_space<vmem>>, vector<16x128xf32>,
    return
  }
  func.func @transform_0(%arg0: i32) -> (i32, i32) {
    %c0_i32 = arith.constant 0 : i32
    %c0_i32_0 = arith.constant 0 : i32
    return %arg0, %c0_i32 : i32, i32
  }
  func.func @transform_1(%arg0: i32) -> (i32, i32) {
    %c0_i32 = arith.constant 0 : i32
    %c0_i32_0 = arith.constant 0 : i32
    %c0_i32_1 = arith.constant 0 : i32
    return %c0_i32, %c0_i32_0 : i32, i32
  }
  func.func @transform_2(%arg0: i32) -> (i32, i32) {
    %c0_i32 = arith.constant 0 : i32
    %c0_i32_0 = arith.constant 0 : i32
    %c0_i32_1 = arith.constant 0 : i32
    return %c0_i32, %c0_i32_0 : i32, i32
  }
  func.func @transform_3(%arg0: i32) -> (i32, i32) {
    %c0_i32 = arith.constant 0 : i32
    %c0_i32_0 = arith.constant 0 : i32
    %c0_i32_1 = arith.constant 0 : i32
    return %c0_i32, %c0_i32_0 : i32, i32
  }
  func.func @transform_4(%arg0: i32) -> (i32, i32) {
    %c0_i32 = arith.constant 0 : i32
    %c0_i32_0 = arith.constant 0 : i32
    %c0_i32_1 = arith.constant 0 : i32
    return %c0_i32, %c0_i32_0 : i32, i32
  }
  func.func @transform_5(%arg0: i32) -> (i32, i32) {
    %c0_i32 = arith.constant 0 : i32
    %c0_i32_0 = arith.constant 0 : i32
    %c0_i32_1 = arith.constant 0 : i32
    return %c0_i32, %c0_i32_0 : i32, i32
  }
  func.func @transform_6(%arg0: i32) -> (i32, i32) {
    %c0_i32 = arith.constant 0 : i32
    %c0_i32_0 = arith.constant 0 : i32
    %c0_i32_1 = arith.constant 0 : i32
    return %c0_i32, %c0_i32_0 : i32, i32
  }
  func.func @transform_7(%arg0: i32) -> (i32, i32) {
    %c0_i32 = arith.constant 0 : i32
    %c0_i32_0 = arith.constant 0 : i32
    return %arg0, %c0_i32 : i32, i32
  }
}

</mosaic_0001>

<llo_original>
// kernel: simple_ffnn_forward.1
$region0: #{simple_ffnn_forward.1}
  #allocation0 [shape = 'u32[]', space=smem, size = 0x4, offset = 0x4, fixed_abs, tag = 'smem constant byte address 0x4 - core index']
  #allocation1 [shape = 'u32[144,128]{1,0:T(1,128)}', space=vmem, size = 0x12000, scoped, tag = 'internal scratch']
  %s0 = inlined_call_operand.vmem [shape: bf16[16,16], index: 0, kind: input, shape index: {}]
  %s1 = inlined_call_operand.vmem [shape: bf16[16,32], index: 1, kind: input, shape index: {}]
  %s2 = inlined_call_operand.vmem [shape: f32[1,32], index: 2, kind: input, shape index: {}]
  %s3 = inlined_call_operand.vmem [shape: bf16[32,32], index: 3, kind: input, shape index: {}]
  %s4 = inlined_call_operand.vmem [shape: f32[1,32], index: 4, kind: input, shape index: {}]
  %s5 = inlined_call_operand.vmem [shape: bf16[32,128], index: 5, kind: input, shape index: {}]
  %s6 = inlined_call_operand.vmem [shape: f32[1,128], index: 6, kind: input, shape index: {}]
  %s7 = inlined_call_operand.vmem [shape: f32[16,128], index: 7, kind: output, shape index: {}]
  %s8 = sld [smem:[#allocation0]]
  $region38: #{simple_ffnn_forward.1} parent=0
    _
  %s10 = ssub.s32 1, %s8
  %s11 = scalar_select 0, %s10, %s8
  // Predicated region
  $region2: #{simple_ffnn_forward.1} parent=0 // pred_check
    _
  $region3: #{simple_ffnn_forward.1} parent=0 // pred_check_branch
    %13 = sbr.rel (0) target = $region5
  $region4: #{simple_ffnn_forward.1} parent=0 // pred_region
    _
  $region5: #{simple_ffnn_forward.1} parent=0 // pred_fallthru
    _
  // Predicated region
  $region6: #{simple_ffnn_forward.1} parent=0 // pred_check
    _
  $region7: #{simple_ffnn_forward.1} parent=0 // pred_check_branch
    %15 = sbr.rel (0) target = $region9
  $region8: #{simple_ffnn_forward.1} parent=0 // pred_region
    _
  $region9: #{simple_ffnn_forward.1} parent=0 // pred_fallthru
    _
  // Predicated region
  $region10: #{simple_ffnn_forward.1} parent=0 // pred_check
    _
  $region11: #{simple_ffnn_forward.1} parent=0 // pred_check_branch
    %17 = sbr.rel (0) target = $region13
  $region12: #{simple_ffnn_forward.1} parent=0 // pred_region
    _
  $region13: #{simple_ffnn_forward.1} parent=0 // pred_fallthru
    _
  // Predicated region
  $region14: #{simple_ffnn_forward.1} parent=0 // pred_check
    _
  $region15: #{simple_ffnn_forward.1} parent=0 // pred_check_branch
    %19 = sbr.rel (0) target = $region17
  $region16: #{simple_ffnn_forward.1} parent=0 // pred_region
    _
  $region17: #{simple_ffnn_forward.1} parent=0 // pred_fallthru
    _
  // Predicated region
  $region18: #{simple_ffnn_forward.1} parent=0 // pred_check
    _
  $region19: #{simple_ffnn_forward.1} parent=0 // pred_check_branch
    %21 = sbr.rel (0) target = $region21
  $region20: #{simple_ffnn_forward.1} parent=0 // pred_region
    _
  $region21: #{simple_ffnn_forward.1} parent=0 // pred_fallthru
    _
  // Predicated region
  $region22: #{simple_ffnn_forward.1} parent=0 // pred_check
    _
  $region23: #{simple_ffnn_forward.1} parent=0 // pred_check_branch
    %23 = sbr.rel (0) target = $region25
  $region24: #{simple_ffnn_forward.1} parent=0 // pred_region
    _
  $region25: #{simple_ffnn_forward.1} parent=0 // pred_fallthru
    _
  // Predicated region
  $region26: #{simple_ffnn_forward.1} parent=0 // pred_check
    _
  $region27: #{simple_ffnn_forward.1} parent=0 // pred_check_branch
    %25 = sbr.rel (0) target = $region29
  $region28: #{simple_ffnn_forward.1} parent=0 // pred_region
    _
  $region29: #{simple_ffnn_forward.1} parent=0 // pred_fallthru
    _
  %v27 = vld [vmem:[%s0] sm:$0xf]
  %v28 = vld [vmem:[%s0 + $0x4] sm:$0xf]
  %v29 = vld [vmem:[%s1] sm:$0xf]
  %v30 = vld [vmem:[%s1 + $0x4] sm:$0xf]
  %v31 = vld [vmem:[%s2] sm:$0x1]
  %v33 = vlaneseq
  %v34 = vshrl.u32 %v33, 7
  %v35 = vsub.s32 0, %v34
  %v36 = vrot.slane %v31, %v35
  %v40 = vunpack.c.l.b16 %v27
  %v41 = vunpack.c.l.b16 %v28
  %v42 = vpack.c.b16 %v41, %v40
  %v45 = vunpack.c.l.b16 %v29
  %v46 = vunpack.c.l.b16 %v30
  %v47 = vpack.c.b16 %v46, %v45
  %vm49 = vcmask 130048
  %v51 = vsel %vm49, %v42, 0
  %53 = vmatprep.subr.bf16.mxu0 0
  %54 = vmatpush1.bf16.msra.mxu0 0
  %55 = vmatprep.subr.bf16.mxu0 0
  %56 = vmatpush1.bf16.msra.mxu0 0
  %57 = vmatprep.subr.bf16.mxu0 0
  %58 = vmatpush1.bf16.msra.mxu0 0
  %59 = vmatprep.subr.bf16.mxu0 0
  %60 = vmatpush1.bf16.msra.mxu0 0
  %61 = vmatprep.subr.bf16.mxu0 0
  %62 = vmatpush1.bf16.msra.mxu0 0
  %63 = vmatprep.subr.bf16.mxu0 0
  %64 = vmatpush1.bf16.msra.mxu0 0
  %65 = vmatprep.subr.bf16.mxu0 0
  %66 = vmatpush1.bf16.msra.mxu0 0
  %67 = vmatprep.subr.bf16.mxu0 0
  %68 = vmatpush1.bf16.msra.mxu0 %v47
  %69 = vmatprep.subr.bf16.mxu0 0
  %70 = vmatpush2.bf16.msra.mxu0 0
  %71 = vmatprep.subr.bf16.mxu0 0
  %72 = vmatpush2.bf16.msra.mxu0 0
  %73 = vmatprep.subr.bf16.mxu0 0
  %74 = vmatpush2.bf16.msra.mxu0 0
  %75 = vmatprep.subr.bf16.mxu0 0
  %76 = vmatpush2.bf16.msra.mxu0 0
  %77 = vmatprep.subr.bf16.mxu0 0
  %78 = vmatpush2.bf16.msra.mxu0 0
  %79 = vmatprep.subr.bf16.mxu0 0
  %80 = vmatpush2.bf16.msra.mxu0 0
  %81 = vmatprep.subr.bf16.mxu0 0
  %82 = vmatpush2.bf16.msra.mxu0 0
  %83 = vmatprep.subr.bf16.mxu0 0
  %84 = vmatpush2.bf16.msra.mxu0 0
  %85 = vmatprep.mubr.bf16.mxu0 0
  %86 = vmatmul.mubr.bf16.gmra.mxu0 %v51
  %v87 = vpop.f32.mrf.mxu0
  %v88 = vadd.f32 %v36, %v87
  %v89 = vpop.f32.mrf.mxu0
  %v90 = vpop.f32.mrf.mxu0
  %v91 = vadd.f32 %v36, %v90
  %v92 = vpop.f32.mrf.mxu0
  %93 = vdwg.mxu0
  %v94 = vmax.f32 %v88, 0.0
  %v95 = vmax.f32 %v91, 0.0
  %v96 = vpack.c.bf16 %v95, %v94
  %v97 = vld [vmem:[%s3] sm:$0xf]
  %v98 = vld [vmem:[%s3 + $0x4] sm:$0xf]
  %v99 = vld [vmem:[%s3 + $0x8] sm:$0xf]
  %v100 = vld [vmem:[%s3 + $0xc] sm:$0xf]
  %v101 = vld [vmem:[%s4] sm:$0x1]
  %v103 = vlaneseq
  %v104 = vshrl.u32 %v103, 7
  %v105 = vsub.s32 0, %v104
  %v106 = vrot.slane %v101, %v105
  %v112 = vunpack.c.l.b16 %v97
  %v113 = vunpack.c.l.b16 %v98
  %v114 = vunpack.c.l.b16 %v99
  %v115 = vunpack.c.l.b16 %v100
  %v116 = vpack.c.b16 %v113, %v112
  %v117 = vpack.c.b16 %v115, %v114
  %vm120 = vcmask 261120
  %v122 = vsel %vm120, %v96, 0
  %124 = vmatprep.subr.bf16.mxu0 0
  %125 = vmatpush1.bf16.msra.mxu0 0
  %126 = vmatprep.subr.bf16.mxu0 0
  %127 = vmatpush1.bf16.msra.mxu0 0
  %128 = vmatprep.subr.bf16.mxu0 0
  %129 = vmatpush1.bf16.msra.mxu0 0
  %130 = vmatprep.subr.bf16.mxu0 0
  %131 = vmatpush1.bf16.msra.mxu0 0
  %132 = vmatprep.subr.bf16.mxu0 0
  %133 = vmatpush1.bf16.msra.mxu0 0
  %134 = vmatprep.subr.bf16.mxu0 0
  %135 = vmatpush1.bf16.msra.mxu0 0
  %136 = vmatprep.subr.bf16.mxu0 0
  %137 = vmatpush1.bf16.msra.mxu0 %v117
  %138 = vmatprep.subr.bf16.mxu0 0
  %139 = vmatpush1.bf16.msra.mxu0 %v116
  %140 = vmatprep.subr.bf16.mxu0 0
  %141 = vmatpush2.bf16.msra.mxu0 0
  %142 = vmatprep.subr.bf16.mxu0 0
  %143 = vmatpush2.bf16.msra.mxu0 0
  %144 = vmatprep.subr.bf16.mxu0 0
  %145 = vmatpush2.bf16.msra.mxu0 0
  %146 = vmatprep.subr.bf16.mxu0 0
  %147 = vmatpush2.bf16.msra.mxu0 0
  %148 = vmatprep.subr.bf16.mxu0 0
  %149 = vmatpush2.bf16.msra.mxu0 0
  %150 = vmatprep.subr.bf16.mxu0 0
  %151 = vmatpush2.bf16.msra.mxu0 0
  %152 = vmatprep.subr.bf16.mxu0 0
  %153 = vmatpush2.bf16.msra.mxu0 0
  %154 = vmatprep.subr.bf16.mxu0 0
  %155 = vmatpush2.bf16.msra.mxu0 0
  %156 = vmatprep.mubr.bf16.mxu0 0
  %157 = vmatmul.mubr.bf16.gmra.mxu0 %v122
  %v158 = vpop.f32.mrf.mxu0
  %v159 = vadd.f32 %v106, %v158
  %v160 = vpop.f32.mrf.mxu0
  %v161 = vpop.f32.mrf.mxu0
  %v162 = vadd.f32 %v106, %v161
  %v163 = vpop.f32.mrf.mxu0
  %164 = vdwg.mxu0
  %v165 = vmax.f32 %v159, 0.0
  %v166 = vmax.f32 %v162, 0.0
  %v167 = vpack.c.bf16 %v166, %v165
  %v168 = vld [vmem:[%s5] sm:$0xf]
  %v169 = vld [vmem:[%s5 + $0x4] sm:$0xf]
  %v170 = vld [vmem:[%s5 + $0x8] sm:$0xf]
  %v171 = vld [vmem:[%s5 + $0xc] sm:$0xf]
  %v172 = vld [vmem:[%s6] sm:$0x1]
  %v174 = vlaneseq
  %v175 = vshrl.u32 %v174, 7
  %v176 = vsub.s32 0, %v175
  %v177 = vrot.slane %v172, %v176
  %v183 = vunpack.c.l.b16 %v168
  %v184 = vunpack.c.l.b16 %v169
  %v185 = vunpack.c.l.b16 %v170
  %v186 = vunpack.c.l.b16 %v171
  %v187 = vpack.c.b16 %v184, %v183
  %v188 = vpack.c.b16 %v186, %v185
  %v192 = vsel %vm120, %v167, 0
  %194 = vmatprep.subr.bf16.mxu0 0
  %195 = vmatpush1.bf16.msra.mxu0 0
  %196 = vmatprep.subr.bf16.mxu0 0
  %197 = vmatpush1.bf16.msra.mxu0 0
  %198 = vmatprep.subr.bf16.mxu0 0
  %199 = vmatpush1.bf16.msra.mxu0 0
  %200 = vmatprep.subr.bf16.mxu0 0
  %201 = vmatpush1.bf16.msra.mxu0 0
  %202 = vmatprep.subr.bf16.mxu0 0
  %203 = vmatpush1.bf16.msra.mxu0 0
  %204 = vmatprep.subr.bf16.mxu0 0
  %205 = vmatpush1.bf16.msra.mxu0 0
  %206 = vmatprep.subr.bf16.mxu0 0
  %207 = vmatpush1.bf16.msra.mxu0 %v188
  %208 = vmatprep.subr.bf16.mxu0 0
  %209 = vmatpush1.bf16.msra.mxu0 %v187
  %210 = vmatprep.subr.bf16.mxu0 0
  %211 = vmatpush2.bf16.msra.mxu0 0
  %212 = vmatprep.subr.bf16.mxu0 0
  %213 = vmatpush2.bf16.msra.mxu0 0
  %214 = vmatprep.subr.bf16.mxu0 0
  %215 = vmatpush2.bf16.msra.mxu0 0
  %216 = vmatprep.subr.bf16.mxu0 0
  %217 = vmatpush2.bf16.msra.mxu0 0
  %218 = vmatprep.subr.bf16.mxu0 0
  %219 = vmatpush2.bf16.msra.mxu0 0
  %220 = vmatprep.subr.bf16.mxu0 0
  %221 = vmatpush2.bf16.msra.mxu0 0
  %222 = vmatprep.subr.bf16.mxu0 0
  %223 = vmatpush2.bf16.msra.mxu0 0
  %224 = vmatprep.subr.bf16.mxu0 0
  %225 = vmatpush2.bf16.msra.mxu0 0
  %226 = vmatprep.mubr.bf16.mxu0 0
  %227 = vmatmul.mubr.bf16.gmra.mxu0 %v192
  %v228 = vpop.f32.mrf.mxu0
  %v229 = vadd.f32 %v177, %v228
  %v230 = vpop.f32.mrf.mxu0
  %v231 = vpop.f32.mrf.mxu0
  %v232 = vadd.f32 %v177, %v231
  %v233 = vpop.f32.mrf.mxu0
  %234 = vdwg.mxu0
  %235 = vst [vmem:[%s7] sm:$0xff] %v229
  %236 = vst [vmem:[%s7 + $0x8] sm:$0xff] %v232
  // Predicated region
  $region30: #{simple_ffnn_forward.1} parent=0 // pred_check
    _
  $region31: #{simple_ffnn_forward.1} parent=0 // pred_check_branch
    %238 = sbr.rel (0) target = $region33
  $region32: #{simple_ffnn_forward.1} parent=0 // pred_region
    _
  $region33: #{simple_ffnn_forward.1} parent=0 // pred_fallthru
    _
  // Predicated region
  $region34: #{simple_ffnn_forward.1} parent=0 // pred_check
    _
  $region35: #{simple_ffnn_forward.1} parent=0 // pred_check_branch
    %240 = sbr.rel (0) target = $region37
  $region36: #{simple_ffnn_forward.1} parent=0 // pred_region
    _
  $region37: #{simple_ffnn_forward.1} parent=0 // pred_fallthru
    _

</llo_original>
